<compile_context>
chip_gen: v5e
topology: v5e:2x2
jax: 0.10.0
libtpu: 0.0.40
codegen_flags: <defaults>
</compile_context>

<pallas_src>
import functools

import jax
import jax.numpy as jnp
from jax.experimental import pallas as pl
from jax.experimental.pallas import tpu as pltpu


def _round_up(x: int, m: int) -> int:
    return (x + m - 1) // m * m


# ----------------------------------------------------------------------------
# Pallas kernel: fused chain of Linear(+tanh) layers (encoder then decoder).
# refs = (x_ref, w0_ref, b0_ref, w1_ref, b1_ref, ..., out_ref)
#   x_ref : (TB, D) batch tile
#   wi    : (in_i, out_i)  (already transposed from PyTorch's (out, in))
#   bi    : (1, out_i)
# ----------------------------------------------------------------------------
def _make_ae_mlp_kernel(n_layers: int, act: bool):
    def kernel(*refs):
        x_ref = refs[0]
        out_ref = refs[-1]
        wb_refs = refs[1:-1]

        h = x_ref[...].astype(jnp.float32)
        for i in range(n_layers):
            w = wb_refs[2 * i][...]        # (in_i, out_i), resident across grid
            b = wb_refs[2 * i + 1][...]    # (1, out_i)
            h = jnp.dot(h, w, preferred_element_type=jnp.float32) + b
            if act:
                h = jnp.tanh(h)
            # TODO(synk): F.dropout only matters in training mode; this kernel
            # implements inference (identity), so dropout is omitted.
        out_ref[...] = h.astype(out_ref.dtype)

    return kernel


# ----------------------------------------------------------------------------
# Parameter construction, matching ae_mlp.__init__ exactly:
#   enc: Linear(seq_len*num_nodes, k[0]), Linear(k[0], k[1]), ...
#   dec: Linear(k[-1], k[-2]), ..., Linear(k[1], k[0]), Linear(k[0], seq_len*num_nodes)
#   nn.init.eye_(weight), bias = 0
# Weights are stored transposed: (in_features, out_features).
# ----------------------------------------------------------------------------
def init_ae_mlp_params(seq_len, num_nodes, kernel_list):
    D = seq_len * num_nodes
    dims = [D] + list(kernel_list)

    params = []
    # encoder
    for i in range(len(kernel_list)):
        in_d, out_d = dims[i], dims[i + 1]
        w = jnp.eye(out_d, in_d, dtype=jnp.float32).T          # (in, out)
        b = jnp.zeros((1, out_d), dtype=jnp.float32)
        params.append((w, b))
    # decoder
    dec_dims = list(reversed(dims))                            # [k[-1], ..., k[0], D]
    for i in range(len(kernel_list)):
        in_d, out_d = dec_dims[i], dec_dims[i + 1]
        w = jnp.eye(out_d, in_d, dtype=jnp.float32).T          # (in, out)
        b = jnp.zeros((1, out_d), dtype=jnp.float32)
        params.append((w, b))
    return params


# ----------------------------------------------------------------------------
# Batch-tile sizing against an explicit VMEM budget (conservative: double
# buffers for the tiled in/out blocks, weights counted twice, plus every
# intermediate activation width once).  Budget chosen so the result also fits
# v7x's 64 MiB physical / 32 MiB default-scoped VMEM with headroom.
# ----------------------------------------------------------------------------
def _choose_batch_tile(B, layer_dims, dtype_bytes=4,
                       vmem_budget=32 * 1024 * 1024):
    b_pad_min = _round_up(max(B, 1), 8)
    weight_bytes = sum((i * o + o) * dtype_bytes for i, o in layer_dims)
    d_in = layer_dims[0][0]
    d_out = layer_dims[-1][1]
    widths = [d_in] + [o for _, o in layer_dims]

    chosen_tb, chosen_need = 8, None
    for tb in (1024, 512, 256, 128, 64, 32, 16, 8):
        if tb > b_pad_min:
            continue
        io_bytes = 2 * tb * d_in * dtype_bytes + 2 * tb * d_out * dtype_bytes
        act_bytes = tb * sum(widths) * dtype_bytes
        need = io_bytes + 2 * weight_bytes + act_bytes
        if need <= vmem_budget:
            return tb, need
        if chosen_need is None:
            chosen_need = need
        chosen_tb, chosen_need = tb, need
    return chosen_tb, chosen_need


# ----------------------------------------------------------------------------
# Forward wrapper (glue reshapes in plain JAX, hot path in the Pallas kernel).
# ----------------------------------------------------------------------------
@functools.partial(jax.jit, static_argnames=("seq_len", "num_nodes", "act"))
def ae_mlp_forward(inputs, params_flat, *, seq_len, num_nodes, act=True):
    """inputs: (B, dim, num_nodes, seq_len)  ->  (B, 1, num_nodes, seq_len)"""
    B = inputs.shape[0]
    D = seq_len * num_nodes

    # inputs[:, :1, :, :].flatten(1)
    # TODO(synk): this slice+flatten could be fused into the kernel via a
    # (TB, 1, N, S) BlockSpec, but the in-kernel reshape to a 128-lane last dim
    # risks a VMEM layout copy; kept in the wrapper for correctness/simplicity.
    x = inputs[:, 0, :, :].reshape(B, D).astype(jnp.float32)

    n_layers = len(params_flat) // 2
    layer_dims = [
        (params_flat[2 * i].shape[0], params_flat[2 * i].shape[1])
        for i in range(n_layers)
    ]

    # ---- batch tiling -------------------------------------------------------
    TB, vmem_need = _choose_batch_tile(B, layer_dims)
    B_pad = _round_up(B, TB)
    if B_pad != B:
        x = jnp.pad(x, ((0, B_pad - B), (0, 0)))
    grid = (B_pad // TB,)

    # x / out tiled over batch; weights & biases resident (constant index map).
    x_spec = pl.BlockSpec((TB, D), lambda i: (i, 0))
    out_spec = pl.BlockSpec((TB, D), lambda i: (i, 0))
    wb_specs = []
    for li in range(n_layers):
        w, b = params_flat[2 * li], params_flat[2 * li + 1]
        wb_specs.append(pl.BlockSpec(w.shape, lambda i: (0, 0)))
        wb_specs.append(pl.BlockSpec(b.shape, lambda i: (0, 0)))

    # ---- scheduler hints ----------------------------------------------------
    flops = 2 * B_pad * sum(i_ * o_ for i_, o_ in layer_dims)
    transcendentals = (B_pad * sum(o_ for _, o_ in layer_dims)) if act else 0
    bytes_accessed = (
        2 * B_pad * D * 4
        + sum((i_ * o_ + o_) * 4 for i_, o_ in layer_dims)
    )
    # Explicit VMEM limit: enough headroom over the estimate, capped at v7x's
    # 64 MiB physical per-TC VMEM (fine on v5e/v6e which have 128 MiB).
    vmem_limit = int(min(64 * 1024 * 1024, max(32 * 1024 * 1024, 2 * vmem_need)))

    kernel = _make_ae_mlp_kernel(n_layers, act)
    y = pl.pallas_call(
        kernel,
        out_shape=jax.ShapeDtypeStruct((B_pad, D), jnp.float32),
        grid_spec=pltpu.PrefetchScalarGridSpec(
            num_scalar_prefetch=0,
            grid=grid,
            in_specs=[x_spec] + wb_specs,
            out_specs=out_spec,
        ),
        compiler_params=pltpu.CompilerParams(
            dimension_semantics=("parallel",),
            vmem_limit_bytes=vmem_limit,
        ),
        cost_estimate=pl.CostEstimate(
            flops=flops,
            transcendentals=transcendentals,
            bytes_accessed=bytes_accessed,
        ),
    )(x, *params_flat)

    y = y[:B]
    # torch.reshape(Y, [B, 1, num_nodes, seq_len])
    return y.reshape(B, 1, num_nodes, seq_len)


if __name__ == "__main__":
    # Small shapes consistent with the module's forward contract.
    batch = 2
    dim = 4
    num_nodes = 16
    seq_len = 8
    kernel_list = [64, 32]
    act = True
    dropout = 0.0  # inference; dropout is a no-op

    key = jax.random.PRNGKey(0)
    inputs = jax.random.normal(
        key, (batch, dim, num_nodes, seq_len), dtype=jnp.float32
    )

    params = init_ae_mlp_params(seq_len, num_nodes, kernel_list)
    params_flat = tuple(p for wb in params for p in wb)

    out = ae_mlp_forward(
        inputs, params_flat, seq_len=seq_len, num_nodes=num_nodes, act=act
    )
    out = jax.block_until_ready(out)

    assert out.shape == (batch, 1, num_nodes, seq_len), out.shape
    assert out.dtype == jnp.float32

    # Reference check in plain JAX (same math as the PyTorch module in eval mode).
    x_ref = inputs[:, 0, :, :].reshape(batch, num_nodes * seq_len)
    h = x_ref
    for li in range(len(params_flat) // 2):
        h = h @ params_flat[2 * li] + params_flat[2 * li + 1]
        if act:
            h = jnp.tanh(h)
    ref = h.reshape(batch, 1, num_nodes, seq_len)
    assert jnp.allclose(out, ref, atol=1e-5, rtol=1e-5)

    print("KERNEL_OK")
</pallas_src>

<mosaic_0001>
module attributes {stable_mosaic.version = 11 : i64} {
  func.func @kernel(%arg0: i32, %arg1: memref<8x128xf32, #tpu.memory_space<vmem>>, %arg2: memref<128x64xf32, #tpu.memory_space<vmem>>, %arg3: memref<1x64xf32, #tpu.memory_space<vmem>>, %arg4: memref<64x32xf32, #tpu.memory_space<vmem>>, %arg5: memref<1x32xf32, #tpu.memory_space<vmem>>, %arg6: memref<32x64xf32, #tpu.memory_space<vmem>>, %arg7: memref<1x64xf32, #tpu.memory_space<vmem>>, %arg8: memref<64x128xf32, #tpu.memory_space<vmem>>, %arg9: memref<1x128xf32, #tpu.memory_space<vmem>>, %arg10: memref<8x128xf32, #tpu.memory_space<vmem>>) attributes {dimension_semantics = [#tpu.dimension_semantics<parallel>], iteration_bounds = array<i64: 1>, scalar_prefetch = 0 : i64, scratch_operands = 0 : i64, tpu.core_type = #tpu.core_type<tc>, window_params = [{transform_indices = @transform_0, window_bounds = array<i64: 8, 128>}, {pipeline_mode = #tpu.pipeline_mode<synchronous>, transform_indices = @transform_1, window_bounds = array<i64: 128, 64>}, {pipeline_mode = #tpu.pipeline_mode<synchronous>, transform_indices = @transform_2, window_bounds = array<i64: 1, 64>}, {pipeline_mode = #tpu.pipeline_mode<synchronous>, transform_indices = @transform_3, window_bounds = array<i64: 64, 32>}, {pipeline_mode = #tpu.pipeline_mode<synchronous>, transform_indices = @transform_4, window_bounds = array<i64: 1, 32>}, {pipeline_mode = #tpu.pipeline_mode<synchronous>, transform_indices = @transform_5, window_bounds = array<i64: 32, 64>}, {pipeline_mode = #tpu.pipeline_mode<synchronous>, transform_indices = @transform_6, window_bounds = array<i64: 1, 64>}, {pipeline_mode = #tpu.pipeline_mode<synchronous>, transform_indices = @transform_7, window_bounds = array<i64: 64, 128>}, {pipeline_mode = #tpu.pipeline_mode<synchronous>, transform_indices = @transform_8, window_bounds = array<i64: 1, 128>}, {transform_indices = @transform_9, window_bounds = array<i64: 8, 128>}]} {
    %c0 = arith.constant 0 : index
    %c0_0 = arith.constant 0 : index
    %0 = vector.load %arg1[%c0, %c0_0] : memref<8x128xf32, #tpu.memory_space<vmem>>, vector<8x128xf32>
    %c0_1 = arith.constant 0 : index
    %c0_2 = arith.constant 0 : index
    %1 = vector.load %arg2[%c0_1, %c0_2] : memref<128x64xf32, #tpu.memory_space<vmem>>, vector<128x64xf32>
    %c0_3 = arith.constant 0 : index
    %c0_4 = arith.constant 0 : index
    %2 = vector.load %arg3[%c0_3, %c0_4] : memref<1x64xf32, #tpu.memory_space<vmem>>, vector<1x64xf32>
    %cst = arith.constant dense<0.000000e+00> : vector<8x64xf32>
    %3 = tpu.matmul %0, %1, %cst {dimension_numbers = #tpu.dot_dimension_numbers<[1], [0], [0], [1], [0, 0, 1, 1], [], []>} : vector<8x128xf32>, vector<128x64xf32>, vector<8x64xf32> -> vector<8x64xf32>
    %4 = vector.broadcast %2 : vector<1x64xf32> to vector<8x64xf32>
    %5 = arith.addf %3, %4 : vector<8x64xf32>
    %6 = math.tanh %5 : vector<8x64xf32>
    %c0_5 = arith.constant 0 : index
    %c0_6 = arith.constant 0 : index
    %7 = vector.load %arg4[%c0_5, %c0_6] : memref<64x32xf32, #tpu.memory_space<vmem>>, vector<64x32xf32>
    %c0_7 = arith.constant 0 : index
    %c0_8 = arith.constant 0 : index
    %8 = vector.load %arg5[%c0_7, %c0_8] : memref<1x32xf32, #tpu.memory_space<vmem>>, vector<1x32xf32>
    %cst_9 = arith.constant dense<0.000000e+00> : vector<8x32xf32>
    %9 = tpu.matmul %6, %7, %cst_9 {dimension_numbers = #tpu.dot_dimension_numbers<[1], [0], [0], [1], [0, 0, 1, 1], [], []>} : vector<8x64xf32>, vector<64x32xf32>, vector<8x32xf32> -> vector<8x32xf32>
    %10 = vector.broadcast %8 : vector<1x32xf32> to vector<8x32xf32>
    %11 = arith.addf %9, %10 : vector<8x32xf32>
    %12 = math.tanh %11 : vector<8x32xf32>
    %c0_10 = arith.constant 0 : index
    %c0_11 = arith.constant 0 : index
    %13 = vector.load %arg6[%c0_10, %c0_11] : memref<32x64xf32, #tpu.memory_space<vmem>>, vector<32x64xf32>
    %c0_12 = arith.constant 0 : index
    %c0_13 = arith.constant 0 : index
    %14 = vector.load %arg7[%c0_12, %c0_13] : memref<1x64xf32, #tpu.memory_space<vmem>>, vector<1x64xf32>
    %cst_14 = arith.constant dense<0.000000e+00> : vector<8x64xf32>
    %15 = tpu.matmul %12, %13, %cst_14 {dimension_numbers = #tpu.dot_dimension_numbers<[1], [0], [0], [1], [0, 0, 1, 1], [], []>} : vector<8x32xf32>, vector<32x64xf32>, vector<8x64xf32> -> vector<8x64xf32>
    %16 = vector.broadcast %14 : vector<1x64xf32> to vector<8x64xf32>
    %17 = arith.addf %15, %16 : vector<8x64xf32>
    %18 = math.tanh %17 : vector<8x64xf32>
    %c0_15 = arith.constant 0 : index
    %c0_16 = arith.constant 0 : index
    %19 = vector.load %arg8[%c0_15, %c0_16] : memref<64x128xf32, #tpu.memory_space<vmem>>, vector<64x128xf32>
    %c0_17 = arith.constant 0 : index
    %c0_18 = arith.constant 0 : index
    %20 = vector.load %arg9[%c0_17, %c0_18] : memref<1x128xf32, #tpu.memory_space<vmem>>, vector<1x128xf32>
    %cst_19 = arith.constant dense<0.000000e+00> : vector<8x128xf32>
    %21 = tpu.matmul %18, %19, %cst_19 {dimension_numbers = #tpu.dot_dimension_numbers<[1], [0], [0], [1], [0, 0, 1, 1], [], []>} : vector<8x64xf32>, vector<64x128xf32>, vector<8x128xf32> -> vector<8x128xf32>
    %22 = vector.broadcast %20 : vector<1x128xf32> to vector<8x128xf32>
    %23 = arith.addf %21, %22 : vector<8x128xf32>
    %24 = math.tanh %23 : vector<8x128xf32>
    %c0_20 = arith.constant 0 : index
    %c0_21 = arith.constant 0 : index
    %25 = vector.load %arg10[%c0_20, %c0_21] : memref<8x128xf32, #tpu.memory_space<vmem>>, vector<8x128xf32>
    tpu.vector_store %arg10[%c0_20, %c0_21], %24 {strides = array<i32>} : memref<8x128xf32, #tpu.memory_space<vmem>>, vector<8x128xf32>,
    return
  }
  func.func @transform_0(%arg0: i32) -> (i32, i32) {
    %c0_i32 = arith.constant 0 : i32
    %c0_i32_0 = arith.constant 0 : i32
    return %arg0, %c0_i32 : i32, i32
  }
  func.func @transform_1(%arg0: i32) -> (i32, i32) {
    %c0_i32 = arith.constant 0 : i32
    %c0_i32_0 = arith.constant 0 : i32
    %c0_i32_1 = arith.constant 0 : i32
    return %c0_i32, %c0_i32_0 : i32, i32
  }
  func.func @transform_2(%arg0: i32) -> (i32, i32) {
    %c0_i32 = arith.constant 0 : i32
    %c0_i32_0 = arith.constant 0 : i32
    %c0_i32_1 = arith.constant 0 : i32
    return %c0_i32, %c0_i32_0 : i32, i32
  }
  func.func @transform_3(%arg0: i32) -> (i32, i32) {
    %c0_i32 = arith.constant 0 : i32
    %c0_i32_0 = arith.constant 0 : i32
    %c0_i32_1 = arith.constant 0 : i32
    return %c0_i32, %c0_i32_0 : i32, i32
  }
  func.func @transform_4(%arg0: i32) -> (i32, i32) {
    %c0_i32 = arith.constant 0 : i32
    %c0_i32_0 = arith.constant 0 : i32
    %c0_i32_1 = arith.constant 0 : i32
    return %c0_i32, %c0_i32_0 : i32, i32
  }
  func.func @transform_5(%arg0: i32) -> (i32, i32) {
    %c0_i32 = arith.constant 0 : i32
    %c0_i32_0 = arith.constant 0 : i32
    %c0_i32_1 = arith.constant 0 : i32
    return %c0_i32, %c0_i32_0 : i32, i32
  }
  func.func @transform_6(%arg0: i32) -> (i32, i32) {
    %c0_i32 = arith.constant 0 : i32
    %c0_i32_0 = arith.constant 0 : i32
    %c0_i32_1 = arith.constant 0 : i32
    return %c0_i32, %c0_i32_0 : i32, i32
  }
  func.func @transform_7(%arg0: i32) -> (i32, i32) {
    %c0_i32 = arith.constant 0 : i32
    %c0_i32_0 = arith.constant 0 : i32
    %c0_i32_1 = arith.constant 0 : i32
    return %c0_i32, %c0_i32_0 : i32, i32
  }
  func.func @transform_8(%arg0: i32) -> (i32, i32) {
    %c0_i32 = arith.constant 0 : i32
    %c0_i32_0 = arith.constant 0 : i32
    %c0_i32_1 = arith.constant 0 : i32
    return %c0_i32, %c0_i32_0 : i32, i32
  }
  func.func @transform_9(%arg0: i32) -> (i32, i32) {
    %c0_i32 = arith.constant 0 : i32
    %c0_i32_0 = arith.constant 0 : i32
    return %arg0, %c0_i32 : i32, i32
  }
}

</mosaic_0001>

<llo_original>
// kernel: squeeze.1
$region0: #{squeeze.1}
  %s0 = inlined_call_operand.vmem [shape: f32[2,1,16,8], index: 0, kind: input, shape index: {}]
  %s1 = inlined_call_operand.vmem [shape: f32[2,128], index: 1, kind: output, shape index: {}]
  $region1: #{squeeze.1} parent=0
    #allocation0 [shape = 'u8[4096]{0}', space=vmem, size = 0x1000, scoped, tag = 'scoped mem for output reshape']
    %s2 = smov 3
    %v3 = vld [vmem:[%s0] ss:$16 sm:%s2]
    %vm4 = vcmask 64512
    %5 = vst.msk [vmem:[#allocation0] sm:$0x3] %vm4, %v3
    %s6 = scalar_lea.vmem %s0, 15
    %s7 = smov 3
    %v8 = vld [vmem:[%s6] ss:$16 sm:%s7]
    %9 = vrot.lane.b32.xlu0 %v8, 120
    %v10 = vpop.permute.xlu0 %9
    %vm11 = vcmask 1048512
    %12 = vst.msk [vmem:[#allocation0] sm:$0x3] %vm11, %v10
    %s13 = scalar_lea.vmem %s0, 14
    %s14 = smov 3
    %v15 = vld [vmem:[%s13] ss:$16 sm:%s14]
    %16 = vrot.lane.b32.xlu0 %v15, 112
    %v17 = vpop.permute.xlu0 %16
    %vm18 = vcmask 982912
    %19 = vst.msk [vmem:[#allocation0] sm:$0x3] %vm18, %v17
    %s20 = scalar_lea.vmem %s0, 13
    %s21 = smov 3
    %v22 = vld [vmem:[%s20] ss:$16 sm:%s21]
    %23 = vrot.lane.b32.xlu0 %v22, 104
    %v24 = vpop.permute.xlu0 %23
    %vm25 = vcmask 917312
    %26 = vst.msk [vmem:[#allocation0] sm:$0x3] %vm25, %v24
    %s27 = scalar_lea.vmem %s0, 12
    %s28 = smov 3
    %v29 = vld [vmem:[%s27] ss:$16 sm:%s28]
    %30 = vrot.lane.b32.xlu0 %v29, 96
    %v31 = vpop.permute.xlu0 %30
    %vm32 = vcmask 851712
    %33 = vst.msk [vmem:[#allocation0] sm:$0x3] %vm32, %v31
    %s34 = scalar_lea.vmem %s0, 11
    %s35 = smov 3
    %v36 = vld [vmem:[%s34] ss:$16 sm:%s35]
    %37 = vrot.lane.b32.xlu0 %v36, 88
    %v38 = vpop.permute.xlu0 %37
    %vm39 = vcmask 786112
    %40 = vst.msk [vmem:[#allocation0] sm:$0x3] %vm39, %v38
    %s41 = scalar_lea.vmem %s0, 10
    %s42 = smov 3
    %v43 = vld [vmem:[%s41] ss:$16 sm:%s42]
    %44 = vrot.lane.b32.xlu0 %v43, 80
    %v45 = vpop.permute.xlu0 %44
    %vm46 = vcmask 720512
    %47 = vst.msk [vmem:[#allocation0] sm:$0x3] %vm46, %v45
    %s48 = scalar_lea.vmem %s0, 9
    %s49 = smov 3
    %v50 = vld [vmem:[%s48] ss:$16 sm:%s49]
    %51 = vrot.lane.b32.xlu0 %v50, 72
    %v52 = vpop.permute.xlu0 %51
    %vm53 = vcmask 654912
    %54 = vst.msk [vmem:[#allocation0] sm:$0x3] %vm53, %v52
    %s55 = scalar_lea.vmem %s0, 8
    %s56 = smov 3
    %v57 = vld [vmem:[%s55] ss:$16 sm:%s56]
    %58 = vrot.lane.b32.xlu0 %v57, 64
    %v59 = vpop.permute.xlu0 %58
    %vm60 = vcmask 589312
    %61 = vst.msk [vmem:[#allocation0] sm:$0x3] %vm60, %v59
    %s62 = scalar_lea.vmem %s0, 7
    %s63 = smov 3
    %v64 = vld [vmem:[%s62] ss:$16 sm:%s63]
    %65 = vrot.lane.b32.xlu0 %v64, 56
    %v66 = vpop.permute.xlu0 %65
    %vm67 = vcmask 523712
    %68 = vst.msk [vmem:[#allocation0] sm:$0x3] %vm67, %v66
    %s69 = scalar_lea.vmem %s0, 6
    %s70 = smov 3
    %v71 = vld [vmem:[%s69] ss:$16 sm:%s70]
    %72 = vrot.lane.b32.xlu0 %v71, 48
    %v73 = vpop.permute.xlu0 %72
    %vm74 = vcmask 458112
    %75 = vst.msk [vmem:[#allocation0] sm:$0x3] %vm74, %v73
    %s76 = scalar_lea.vmem %s0, 5
    %s77 = smov 3
    %v78 = vld [vmem:[%s76] ss:$16 sm:%s77]
    %79 = vrot.lane.b32.xlu0 %v78, 40
    %v80 = vpop.permute.xlu0 %79
    %vm81 = vcmask 392512
    %82 = vst.msk [vmem:[#allocation0] sm:$0x3] %vm81, %v80
    %s83 = scalar_lea.vmem %s0, 4
    %s84 = smov 3
    %v85 = vld [vmem:[%s83] ss:$16 sm:%s84]
    %86 = vrot.lane.b32.xlu0 %v85, 32
    %v87 = vpop.permute.xlu0 %86
    %vm88 = vcmask 326912
    %89 = vst.msk [vmem:[#allocation0] sm:$0x3] %vm88, %v87
    %s90 = scalar_lea.vmem %s0, 3
    %s91 = smov 3
    %v92 = vld [vmem:[%s90] ss:$16 sm:%s91]
    %93 = vrot.lane.b32.xlu0 %v92, 24
    %v94 = vpop.permute.xlu0 %93
    %vm95 = vcmask 261312
    %96 = vst.msk [vmem:[#allocation0] sm:$0x3] %vm95, %v94
    %s97 = scalar_lea.vmem %s0, 2
    %s98 = smov 3
    %v99 = vld [vmem:[%s97] ss:$16 sm:%s98]
    %100 = vrot.lane.b32.xlu0 %v99, 16
    %v101 = vpop.permute.xlu0 %100
    %vm102 = vcmask 195712
    %103 = vst.msk [vmem:[#allocation0] sm:$0x3] %vm102, %v101
    %s104 = scalar_lea.vmem %s0, 1
    %s105 = smov 3
    %v106 = vld [vmem:[%s104] ss:$16 sm:%s105]
    %107 = vrot.lane.b32.xlu0 %v106, 8
    %v108 = vpop.permute.xlu0 %107
    %vm109 = vcmask 130112
    %110 = vst.msk [vmem:[#allocation0] sm:$0x3] %vm109, %v108
    %s112 = ssub.s32 4, 1
    %v113 = vld [vmem:[#allocation0] sm:%s112]
    %s115 = ssub.s32 4, 1
    %116 = vst [vmem:[%s1] sm:%s115] %v113

// kernel: ae_mlp_forward.1
$region0: #{ae_mlp_forward.1}
  #allocation0 [shape = 'u32[]', space=smem, size = 0x4, offset = 0x4, fixed_abs, tag = 'smem constant byte address 0x4 - core index']
  #allocation1 [shape = 'u32[72,128]{1,0:T(1,128)}', space=vmem, size = 0x9000, scoped, tag = 'internal scratch']
  %s0 = inlined_call_operand.vmem [shape: f32[8,128], index: 0, kind: input, shape index: {}]
  %s1 = inlined_call_operand.vmem [shape: f32[128,64], index: 1, kind: input, shape index: {}]
  %s2 = inlined_call_operand.vmem [shape: f32[1,64], index: 2, kind: input, shape index: {}]
  %s3 = inlined_call_operand.vmem [shape: f32[64,32], index: 3, kind: input, shape index: {}]
  %s4 = inlined_call_operand.vmem [shape: f32[1,32], index: 4, kind: input, shape index: {}]
  %s5 = inlined_call_operand.vmem [shape: f32[32,64], index: 5, kind: input, shape index: {}]
  %s6 = inlined_call_operand.vmem [shape: f32[1,64], index: 6, kind: input, shape index: {}]
  %s7 = inlined_call_operand.vmem [shape: f32[64,128], index: 7, kind: input, shape index: {}]
  %s8 = inlined_call_operand.vmem [shape: f32[1,128], index: 8, kind: input, shape index: {}]
  %s9 = inlined_call_operand.vmem [shape: f32[8,128], index: 9, kind: output, shape index: {}]
  %s10 = sld [smem:[#allocation0]]
  $region46: #{ae_mlp_forward.1} parent=0
    _
  %s12 = ssub.s32 1, %s10
  %s13 = scalar_select 0, %s12, %s10
  // Predicated region
  $region2: #{ae_mlp_forward.1} parent=0 // pred_check
    _
  $region3: #{ae_mlp_forward.1} parent=0 // pred_check_branch
    %15 = sbr.rel (0) target = $region5
  $region4: #{ae_mlp_forward.1} parent=0 // pred_region
    _
  $region5: #{ae_mlp_forward.1} parent=0 // pred_fallthru
    _
  // Predicated region
  $region6: #{ae_mlp_forward.1} parent=0 // pred_check
    _
  $region7: #{ae_mlp_forward.1} parent=0 // pred_check_branch
    %17 = sbr.rel (0) target = $region9
  $region8: #{ae_mlp_forward.1} parent=0 // pred_region
    _
  $region9: #{ae_mlp_forward.1} parent=0 // pred_fallthru
    _
  // Predicated region
  $region10: #{ae_mlp_forward.1} parent=0 // pred_check
    _
  $region11: #{ae_mlp_forward.1} parent=0 // pred_check_branch
    %19 = sbr.rel (0) target = $region13
  $region12: #{ae_mlp_forward.1} parent=0 // pred_region
    _
  $region13: #{ae_mlp_forward.1} parent=0 // pred_fallthru
    _
  // Predicated region
  $region14: #{ae_mlp_forward.1} parent=0 // pred_check
    _
  $region15: #{ae_mlp_forward.1} parent=0 // pred_check_branch
    %21 = sbr.rel (0) target = $region17
  $region16: #{ae_mlp_forward.1} parent=0 // pred_region
    _
  $region17: #{ae_mlp_forward.1} parent=0 // pred_fallthru
    _
  // Predicated region
  $region18: #{ae_mlp_forward.1} parent=0 // pred_check
    _
  $region19: #{ae_mlp_forward.1} parent=0 // pred_check_branch
    %23 = sbr.rel (0) target = $region21
  $region20: #{ae_mlp_forward.1} parent=0 // pred_region
    _
  $region21: #{ae_mlp_forward.1} parent=0 // pred_fallthru
    _
  // Predicated region
  $region22: #{ae_mlp_forward.1} parent=0 // pred_check
    _
  $region23: #{ae_mlp_forward.1} parent=0 // pred_check_branch
    %25 = sbr.rel (0) target = $region25
  $region24: #{ae_mlp_forward.1} parent=0 // pred_region
    _
  $region25: #{ae_mlp_forward.1} parent=0 // pred_fallthru
    _
  // Predicated region
  $region26: #{ae_mlp_forward.1} parent=0 // pred_check
    _
  $region27: #{ae_mlp_forward.1} parent=0 // pred_check_branch
    %27 = sbr.rel (0) target = $region29
  $region28: #{ae_mlp_forward.1} parent=0 // pred_region
    _
  $region29: #{ae_mlp_forward.1} parent=0 // pred_fallthru
    _
  // Predicated region
  $region30: #{ae_mlp_forward.1} parent=0 // pred_check
    _
  $region31: #{ae_mlp_forward.1} parent=0 // pred_check_branch
    %29 = sbr.rel (0) target = $region33
  $region32: #{ae_mlp_forward.1} parent=0 // pred_region
    _
  $region33: #{ae_mlp_forward.1} parent=0 // pred_fallthru
    _
  // Predicated region
  $region34: #{ae_mlp_forward.1} parent=0 // pred_check
    _
  $region35: #{ae_mlp_forward.1} parent=0 // pred_check_branch
    %31 = sbr.rel (0) target = $region37
  $region36: #{ae_mlp_forward.1} parent=0 // pred_region
    _
  $region37: #{ae_mlp_forward.1} parent=0 // pred_fallthru
    _
  %v32 = vld [vmem:[%s0] sm:$0xff]
  %v33 = vld [vmem:[%s1] sm:$0xff]
  %v34 = vld [vmem:[%s1 + $0x8] sm:$0xff]
  %v35 = vld [vmem:[%s1 + $0x10] sm:$0xff]
  %v36 = vld [vmem:[%s1 + $0x18] sm:$0xff]
  %v37 = vld [vmem:[%s1 + $0x20] sm:$0xff]
  %v38 = vld [vmem:[%s1 + $0x28] sm:$0xff]
  %v39 = vld [vmem:[%s1 + $0x30] sm:$0xff]
  %v40 = vld [vmem:[%s1 + $0x38] sm:$0xff]
  %v41 = vld [vmem:[%s1 + $0x40] sm:$0xff]
  %v42 = vld [vmem:[%s1 + $0x48] sm:$0xff]
  %v43 = vld [vmem:[%s1 + $0x50] sm:$0xff]
  %v44 = vld [vmem:[%s1 + $0x58] sm:$0xff]
  %v45 = vld [vmem:[%s1 + $0x60] sm:$0xff]
  %v46 = vld [vmem:[%s1 + $0x68] sm:$0xff]
  %v47 = vld [vmem:[%s1 + $0x70] sm:$0xff]
  %v48 = vld [vmem:[%s1 + $0x78] sm:$0xff]
  %v49 = vld [vmem:[%s2] sm:$0x1]
  %v51 = vperm.slane %v49, 0
  %53 = vmatpush.msra.mxu0 %v48
  %54 = vmatpush.msra.mxu0 %v47
  %55 = vmatpush.msra.mxu0 %v46
  %56 = vmatpush.msra.mxu0 %v45
  %57 = vmatpush.msra.mxu0 %v44
  %58 = vmatpush.msra.mxu0 %v43
  %59 = vmatpush.msra.mxu0 %v42
  %60 = vmatpush.msra.mxu0 %v41
  %61 = vmatpush.msra.mxu0 %v40
  %62 = vmatpush.msra.mxu0 %v39
  %63 = vmatpush.msra.mxu0 %v38
  %64 = vmatpush.msra.mxu0 %v37
  %65 = vmatpush.msra.mxu0 %v36
  %66 = vmatpush.msra.mxu0 %v35
  %67 = vmatpush.msra.mxu0 %v34
  %68 = vmatpush.msra.mxu0 %v33
  %69 = vmatmul.f32.gmra.mxu0 %v32
  %v70 = vpop.f32.mrf.mxu0
  %v71 = vadd.f32 %v51, %v70
  %72 = vdwg.mxu0
  %v73 = vtanh.pop %v71
  %v74 = vld [vmem:[%s3] sm:$0xff]
  %v75 = vld [vmem:[%s3 + $0x8] sm:$0xff]
  %v76 = vld [vmem:[%s3 + $0x10] sm:$0xff]
  %v77 = vld [vmem:[%s3 + $0x18] sm:$0xff]
  %v78 = vld [vmem:[%s3 + $0x20] sm:$0xff]
  %v79 = vld [vmem:[%s3 + $0x28] sm:$0xff]
  %v80 = vld [vmem:[%s3 + $0x30] sm:$0xff]
  %v81 = vld [vmem:[%s3 + $0x38] sm:$0xff]
  %v82 = vld [vmem:[%s4] sm:$0x1]
  %v84 = vperm.slane %v82, 0
  %vm86 = vcmask 523264
  %v88 = vsel %vm86, %v73, 0
  %90 = vmatpush.msra.mxu0 0.0
  %91 = vmatpush.msra.mxu0 0.0
  %92 = vmatpush.msra.mxu0 0.0
  %93 = vmatpush.msra.mxu0 0.0
  %94 = vmatpush.msra.mxu0 0.0
  %95 = vmatpush.msra.mxu0 0.0
  %96 = vmatpush.msra.mxu0 0.0
  %97 = vmatpush.msra.mxu0 0.0
  %98 = vmatpush.msra.mxu0 %v81
  %99 = vmatpush.msra.mxu0 %v80
  %100 = vmatpush.msra.mxu0 %v79
  %101 = vmatpush.msra.mxu0 %v78
  %102 = vmatpush.msra.mxu0 %v77
  %103 = vmatpush.msra.mxu0 %v76
  %104 = vmatpush.msra.mxu0 %v75
  %105 = vmatpush.msra.mxu0 %v74
  %106 = vmatmul.f32.gmra.mxu0 %v88
  %v107 = vpop.f32.mrf.mxu0
  %v108 = vadd.f32 %v84, %v107
  %109 = vdwg.mxu0
  %v110 = vtanh.pop %v108
  %v111 = vld [vmem:[%s5] sm:$0xff]
  %v112 = vld [vmem:[%s5 + $0x8] sm:$0xff]
  %v113 = vld [vmem:[%s5 + $0x10] sm:$0xff]
  %v114 = vld [vmem:[%s5 + $0x18] sm:$0xff]
  %v115 = vld [vmem:[%s6] sm:$0x1]
  %v117 = vperm.slane %v115, 0
  %vm119 = vcmask 261120
  %v121 = vsel %vm119, %v110, 0
  %123 = vmatpush.msra.mxu0 0.0
  %124 = vmatpush.msra.mxu0 0.0
  %125 = vmatpush.msra.mxu0 0.0
  %126 = vmatpush.msra.mxu0 0.0
  %127 = vmatpush.msra.mxu0 0.0
  %128 = vmatpush.msra.mxu0 0.0
  %129 = vmatpush.msra.mxu0 0.0
  %130 = vmatpush.msra.mxu0 0.0
  %131 = vmatpush.msra.mxu0 0.0
  %132 = vmatpush.msra.mxu0 0.0
  %133 = vmatpush.msra.mxu0 0.0
  %134 = vmatpush.msra.mxu0 0.0
  %135 = vmatpush.msra.mxu0 %v114
  %136 = vmatpush.msra.mxu0 %v113
  %137 = vmatpush.msra.mxu0 %v112
  %138 = vmatpush.msra.mxu0 %v111
  %139 = vmatmul.f32.gmra.mxu0 %v121
  %v140 = vpop.f32.mrf.mxu0
  %v141 = vadd.f32 %v117, %v140
  %142 = vdwg.mxu0
  %v143 = vtanh.pop %v141
  %v144 = vld [vmem:[%s7] sm:$0xff]
  %v145 = vld [vmem:[%s7 + $0x8] sm:$0xff]
  %v146 = vld [vmem:[%s7 + $0x10] sm:$0xff]
  %v147 = vld [vmem:[%s7 + $0x18] sm:$0xff]
  %v148 = vld [vmem:[%s7 + $0x20] sm:$0xff]
  %v149 = vld [vmem:[%s7 + $0x28] sm:$0xff]
  %v150 = vld [vmem:[%s7 + $0x30] sm:$0xff]
  %v151 = vld [vmem:[%s7 + $0x38] sm:$0xff]
  %v152 = vld [vmem:[%s8] sm:$0x1]
  %v154 = vperm.slane %v152, 0
  %v157 = vsel %vm86, %v143, 0
  %159 = vmatpush.msra.mxu0 0.0
  %160 = vmatpush.msra.mxu0 0.0
  %161 = vmatpush.msra.mxu0 0.0
  %162 = vmatpush.msra.mxu0 0.0
  %163 = vmatpush.msra.mxu0 0.0
  %164 = vmatpush.msra.mxu0 0.0
  %165 = vmatpush.msra.mxu0 0.0
  %166 = vmatpush.msra.mxu0 0.0
  %167 = vmatpush.msra.mxu0 %v151
  %168 = vmatpush.msra.mxu0 %v150
  %169 = vmatpush.msra.mxu0 %v149
  %170 = vmatpush.msra.mxu0 %v148
  %171 = vmatpush.msra.mxu0 %v147
  %172 = vmatpush.msra.mxu0 %v146
  %173 = vmatpush.msra.mxu0 %v145
  %174 = vmatpush.msra.mxu0 %v144
  %175 = vmatmul.f32.gmra.mxu0 %v157
  %v176 = vpop.f32.mrf.mxu0
  %v177 = vadd.f32 %v154, %v176
  %178 = vdwg.mxu0
  %v179 = vtanh.pop %v177
  %180 = vst [vmem:[%s9] sm:$0xff] %v179
  // Predicated region
  $region38: #{ae_mlp_forward.1} parent=0 // pred_check
    _
  $region39: #{ae_mlp_forward.1} parent=0 // pred_check_branch
    %182 = sbr.rel (0) target = $region41
  $region40: #{ae_mlp_forward.1} parent=0 // pred_region
    _
  $region41: #{ae_mlp_forward.1} parent=0 // pred_fallthru
    _
  // Predicated region
  $region42: #{ae_mlp_forward.1} parent=0 // pred_check
    _
  $region43: #{ae_mlp_forward.1} parent=0 // pred_check_branch
    %184 = sbr.rel (0) target = $region45
  $region44: #{ae_mlp_forward.1} parent=0 // pred_region
    _
  $region45: #{ae_mlp_forward.1} parent=0 // pred_fallthru
    _

</llo_original>
